<compile_context>
chip_gen: v7x
topology: tpu7x:2x2x1
jax: 0.10.0
libtpu: 0.0.40
codegen_flags: <defaults>
</compile_context>

<pallas_src>
import jax
import jax.numpy as jnp
from jax.experimental import pallas as pl
from jax.experimental.pallas import tpu as pltpu


# ----------------------------- helpers ------------------------------------ #

def _round_up(x, m):
    return ((x + m - 1) // m) * m


def _vmem_budget_bytes():
    """Usable VMEM budget: physical capacity minus ~20% headroom for Mosaic
    internal scratch / spills. Falls back to a v7x-safe value off-TPU."""
    try:
        cap = int(pltpu.get_tpu_info().vmem_capacity_bytes)
    except Exception:
        cap = 64 * 1024 * 1024  # conservative (v7x-sized) fallback
    return max(16 * 1024 * 1024, int(cap * 0.8))


def _buffered_spec(shape, index_map, buffers):
    """BlockSpec with an explicit pipeline buffer count; falls back to the
    default (double-buffered) spec if pipeline_mode= is unavailable."""
    try:
        return pl.BlockSpec(shape, index_map, pipeline_mode=pl.Buffered(buffers))
    except Exception:
        return pl.BlockSpec(shape, index_map)


# ----------------------------- kernel ------------------------------------- #

def _linear_kernel(x_ref, w_ref, b_ref, o_ref):
    # x: [TB, C], w: [C, TN], b: [1, TN] -> o: [TB, OUT_N]  (OUT_N <= TN)
    acc = jnp.dot(x_ref[...], w_ref[...], preferred_element_type=jnp.float32)
    acc = acc + b_ref[...]
    # OUT_N == TN in the padded/N-tiled path (no-op slice); OUT_N == O in the
    # small-O direct-write path (avoids 16x output write amplification).
    o_ref[...] = acc[:, : o_ref.shape[-1]].astype(o_ref.dtype)


# ----------------------------- wrapper ------------------------------------ #

def prepare_params(weight, bias, *, dtype=jnp.float32):
    """One-time conversion of PyTorch nn.Linear params (weight [O, C], bias [O])
    into a [C, O_pad] MXU/lane-friendly layout plus bias [1, O_pad]."""
    O, C = weight.shape
    O_pad = _round_up(O, 128)
    if O_pad > 128:
        O_pad = _round_up(O, 256)  # feed the full 256-wide MXU on v6e/v7x
    w_t = jnp.zeros((C, O_pad), dtype).at[:, :O].set(weight.T.astype(dtype))
    b = jnp.zeros((1, O_pad), jnp.float32).at[0, :O].set(bias.astype(jnp.float32))
    return w_t, b


def linear_prob_speed(context, w_t_padded, b_padded, other_dim, *, use_bf16=False):
    """Forward pass of LinearProbSpeed.

    context: [B, C] f32, w_t_padded: [C, O_pad], b_padded: [1, O_pad].
    Returns [B, other_dim] f32.
    """
    B, C = context.shape
    Cw, O_pad = w_t_padded.shape
    assert Cw == C
    O = int(other_dim)
    assert O <= O_pad

    if use_bf16:
        # bf16 operands, f32 accumulation (relaxed-tolerance fast path).
        context = context.astype(jnp.bfloat16)
        w_t_padded = w_t_padded.astype(jnp.bfloat16)

    x_elem = jnp.dtype(context.dtype).itemsize
    w_elem = jnp.dtype(w_t_padded.dtype).itemsize
    budget = _vmem_budget_bytes()
    headroom = 2 * 1024 * 1024

    # --- N (output) tiling: keep the resident weight under ~1/3 of budget. ---
    if C * O_pad * w_elem <= budget // 3:
        TN = O_pad
    else:
        TN = 256 if (O_pad % 256 == 0) else 128
    grid_n = O_pad // TN
    # Single-buffer weight/bias only when their index_map is grid-invariant.
    w_buffers = 1 if grid_n == 1 else 2
    w_resident = w_buffers * (C * TN * w_elem + TN * 4)

    # --- Output layout. ---
    direct_out = (grid_n == 1) and (O < O_pad)
    OUT_N = O if direct_out else TN
    out_cols = O if direct_out else O_pad

    # --- Adaptive batch tile: ~2 MiB of streaming (x + out) per grid step. ---
    stream_row_bytes = C * x_elem + OUT_N * 4
    TB = (2 * 1024 * 1024) // max(stream_row_bytes, 1)
    TB = max(8, min(_round_up(TB, 8), 4096))
    # Bound by VMEM: double-buffered streaming operands + resident weight.
    tb_max = (budget - w_resident - headroom) // (2 * stream_row_bytes)
    TB = max(8, min(TB, (tb_max // 8) * 8))
    TB = min(TB, _round_up(B, 8))
    grid_b = pl.cdiv(B, TB)
    # v7x megacore: make sure large batches span both TensorCores.
    if B > 1024 and grid_b < 2:
        TB = _round_up(pl.cdiv(B, 2), 8)
        grid_b = pl.cdiv(B, TB)

    # --- VMEM accounting (no double counting): 2x streaming + 1x/2x weight. ---
    needed = 2 * TB * stream_row_bytes + w_resident + headroom
    vmem_limit = int(min(max(needed, 8 * 1024 * 1024), budget))

    cost = pl.CostEstimate(
        flops=2 * B * C * O_pad,
        transcendentals=0,
        bytes_accessed=B * C * x_elem + C * O_pad * w_elem + O_pad * 4
        + B * out_cols * 4,
    )

    out = pl.pallas_call(
        _linear_kernel,
        out_shape=jax.ShapeDtypeStruct((B, out_cols), jnp.float32),
        grid=(grid_b, grid_n),
        in_specs=[
            pl.BlockSpec((TB, C), lambda i, j: (i, 0)),
            _buffered_spec((C, TN), lambda i, j: (0, j), w_buffers),
            _buffered_spec((1, TN), lambda i, j: (0, j), w_buffers),
        ],
        out_specs=pl.BlockSpec((TB, OUT_N), lambda i, j: (i, j)),
        compiler_params=pltpu.CompilerParams(
            dimension_semantics=("parallel", "parallel"),
            vmem_limit_bytes=vmem_limit,
        ),
        cost_estimate=cost,
    )(context, w_t_padded, b_padded)

    return out if out_cols == O else out[:, :O]


def init_linear_params(key, context_dim, other_dim):
    """Deterministic init mirroring torch.nn.Linear's default
    (uniform in [-1/sqrt(fan_in), 1/sqrt(fan_in)]), PyTorch layout."""
    kw, kb = jax.random.split(key)
    bound = 1.0 / jnp.sqrt(jnp.float32(context_dim))
    weight = jax.random.uniform(
        kw, (other_dim, context_dim), dtype=jnp.float32, minval=-bound, maxval=bound
    )
    bias = jax.random.uniform(
        kb, (other_dim,), dtype=jnp.float32, minval=-bound, maxval=bound
    )
    return weight, bias


# TODO(synk): LinearProbSpeed.loss (MSE) is a trivial reduction; left to plain
# JAX at the call site rather than a dedicated Pallas kernel.

if __name__ == "__main__":
    key = jax.random.PRNGKey(0)
    k_ctx, k_params = jax.random.split(key)

    batch = 8
    context_dim = 32
    other_dim = 8

    context = jax.random.normal(k_ctx, (batch, context_dim), dtype=jnp.float32)
    weight, bias = init_linear_params(k_params, context_dim, other_dim)

    # One-time param layout conversion (outside the per-call hot path).
    w_t_padded, b_padded = prepare_params(weight, bias)

    speed = linear_prob_speed(context, w_t_padded, b_padded, other_dim)
    speed = jax.block_until_ready(speed)

    # Correctness check against a plain-JAX reference of the PyTorch forward.
    ref = context @ weight.T + bias
    assert speed.shape == (batch, other_dim)
    assert jnp.allclose(speed, ref, atol=1e-5, rtol=1e-5)

    print("KERNEL_OK")
</pallas_src>

<mosaic_0001>
module attributes {stable_mosaic.version = 11 : i64} {
  func.func @_linear_kernel(%arg0: i32, %arg1: i32, %arg2: memref<8x32xf32, #tpu.memory_space<vmem>>, %arg3: memref<32x128xf32, #tpu.memory_space<vmem>>, %arg4: memref<1x128xf32, #tpu.memory_space<vmem>>, %arg5: memref<8x8xf32, #tpu.memory_space<vmem>>) attributes {dimension_semantics = [#tpu.dimension_semantics<parallel>, #tpu.dimension_semantics<parallel>], iteration_bounds = array<i64: 1, 1>, scalar_prefetch = 0 : i64, scratch_operands = 0 : i64, tpu.core_type = #tpu.core_type<tc>, window_params = [{transform_indices = @transform_0, window_bounds = array<i64: 8, 32>}, {pipeline_mode = #tpu.pipeline_mode<synchronous>, transform_indices = @transform_1, window_bounds = array<i64: 32, 128>}, {pipeline_mode = #tpu.pipeline_mode<synchronous>, transform_indices = @transform_2, window_bounds = array<i64: 1, 128>}, {transform_indices = @transform_3, window_bounds = array<i64: 8, 8>}]} {
    %c0 = arith.constant 0 : index
    %c0_0 = arith.constant 0 : index
    %0 = vector.load %arg2[%c0, %c0_0] : memref<8x32xf32, #tpu.memory_space<vmem>>, vector<8x32xf32>
    %c0_1 = arith.constant 0 : index
    %c0_2 = arith.constant 0 : index
    %1 = vector.load %arg3[%c0_1, %c0_2] : memref<32x128xf32, #tpu.memory_space<vmem>>, vector<32x128xf32>
    %cst = arith.constant dense<0.000000e+00> : vector<8x128xf32>
    %2 = tpu.matmul %0, %1, %cst {dimension_numbers = #tpu.dot_dimension_numbers<[1], [0], [0], [1], [0, 0, 1, 1], [], []>} : vector<8x32xf32>, vector<32x128xf32>, vector<8x128xf32> -> vector<8x128xf32>
    %c0_3 = arith.constant 0 : index
    %c0_4 = arith.constant 0 : index
    %3 = vector.load %arg4[%c0_3, %c0_4] : memref<1x128xf32, #tpu.memory_space<vmem>>, vector<1x128xf32>
    %4 = vector.broadcast %3 : vector<1x128xf32> to vector<8x128xf32>
    %5 = arith.addf %2, %4 : vector<8x128xf32>
    %6 = vector.extract_strided_slice %5 {offsets = [0, 0], sizes = [8, 8], strides = [1, 1]} : vector<8x128xf32> to vector<8x8xf32>
    %c0_5 = arith.constant 0 : index
    %c0_6 = arith.constant 0 : index
    %7 = vector.load %arg5[%c0_5, %c0_6] : memref<8x8xf32, #tpu.memory_space<vmem>>, vector<8x8xf32>
    tpu.vector_store %arg5[%c0_5, %c0_6], %6 {strides = array<i32>} : memref<8x8xf32, #tpu.memory_space<vmem>>, vector<8x8xf32>,
    return
  }
  func.func @transform_0(%arg0: i32, %arg1: i32) -> (i32, i32) {
    %c0_i32 = arith.constant 0 : i32
    %c0_i32_0 = arith.constant 0 : i32
    return %arg0, %c0_i32 : i32, i32
  }
  func.func @transform_1(%arg0: i32, %arg1: i32) -> (i32, i32) {
    %c0_i32 = arith.constant 0 : i32
    %c0_i32_0 = arith.constant 0 : i32
    return %c0_i32, %arg1 : i32, i32
  }
  func.func @transform_2(%arg0: i32, %arg1: i32) -> (i32, i32) {
    %c0_i32 = arith.constant 0 : i32
    %c0_i32_0 = arith.constant 0 : i32
    return %c0_i32, %arg1 : i32, i32
  }
  func.func @transform_3(%arg0: i32, %arg1: i32) -> (i32, i32) {
    %c0_i32 = arith.constant 0 : i32
    return %arg0, %arg1 : i32, i32
  }
}

</mosaic_0001>

<llo_original>
// kernel: tpu_custom_call.1
$region0: #{tpu_custom_call.1}
  #allocation0 [shape = 'u32[]', space=smem, size = 0x4, offset = 0x4, fixed_abs, tag = 'smem constant byte address 0x4 - core index']
  #allocation1 [shape = 'u32[144,128]{1,0:T(1,128)}', space=vmem, size = 0x12000, scoped, tag = 'internal scratch']
  %s0 = inlined_call_operand.hbm [shape: f32[8,32], index: 0, kind: input, shape index: {}]
  %s1 = inlined_call_operand.hbm [shape: f32[32,128], index: 1, kind: input, shape index: {}]
  %s2 = inlined_call_operand.vmem [shape: f32[1,128], index: 2, kind: input, shape index: {}]
  %s3 = inlined_call_operand.hbm [shape: f32[8,8], index: 3, kind: output, shape index: {}]
  %s4 = sld [smem:[#allocation0]]
  $region30: #{tpu_custom_call.1} parent=0
    _
  %s6 = ssub.s32 1, %s4
  %s7 = scalar_select 0, %s6, %s4
  $region1: #{tpu_custom_call.1} parent=0
    #allocation2 [shape = 'u8[4096]{0}', space=vmem, size = 0x1000, scoped, tag = 'input window, operand 0, single buffered']
    #allocation3 [shape = 's32[1]{0}', space=sflag, size = 0x4, scoped, tag = 'scoped memory for tpu_custom_call.1']
    #allocation4 [shape = 's32[1]{0}', space=sflag, size = 0x4, scoped, tag = 'scoped memory for tpu_custom_call.1']
    #allocation5 [shape = 'u8[16384]{0}', space=vmem, size = 0x4000, scoped, tag = 'input window, operand 1, single buffered']
    #allocation6 [shape = 's32[1]{0}', space=sflag, size = 0x4, scoped, tag = 'scoped memory for tpu_custom_call.1']
    #allocation7 [shape = 'u8[4096]{0}', space=vmem, size = 0x1000, scoped, tag = 'output window, operand 0, single buffered']
    %8 = vsyncpa [#allocation3], 0
    %9 = vsyncpa [#allocation6], 0
    %10 = vsyncpa [#allocation4], 0
    // Predicated region
    $region2: #{tpu_custom_call.1} parent=1 // pred_check
      _
    $region3: #{tpu_custom_call.1} parent=1 // pred_check_branch
      %12 = sbr.rel (0) target = $region5
    $region4: #{tpu_custom_call.1} parent=1 // pred_region
      %s14 = ssub.s32 128, 128
      %15 = vsyncadd [#allocation3], %s14
      %s17 = sshll.u32 [#allocation2], 4
      %s18 = int_to_ptr.vmem [resolvable:$true] %s17
      %20 = dma.hbm_to_vmem [thread:$0]  %s0, 128, %s18, [#allocation3]
    $region5: #{tpu_custom_call.1} parent=1 // pred_fallthru
      _
    // Predicated region
    $region6: #{tpu_custom_call.1} parent=1 // pred_check
      _
    $region7: #{tpu_custom_call.1} parent=1 // pred_check_branch
      %22 = sbr.rel (0) target = $region9
    $region8: #{tpu_custom_call.1} parent=1 // pred_region
      %s24 = ssub.s32 512, 512
      %25 = vsyncadd [#allocation6], %s24
      %s26 = sshll.u32 [#allocation5], 4
      %s27 = int_to_ptr.vmem [resolvable:$true] %s26
      %32 = dma.hbm_to_vmem [thread:$0]  %s1, 512, %s27, [#allocation6], 128, 128, 8
    $region9: #{tpu_custom_call.1} parent=1 // pred_fallthru
      _
    // Predicated region
    $region10: #{tpu_custom_call.1} parent=1 // pred_check
      _
    $region11: #{tpu_custom_call.1} parent=1 // pred_check_branch
      %34 = sbr.rel (0) target = $region13
    $region12: #{tpu_custom_call.1} parent=1 // pred_region
      _
    $region13: #{tpu_custom_call.1} parent=1 // pred_fallthru
      _
    // Predicated region
    $region14: #{tpu_custom_call.1} parent=1 // pred_check
      _
    $region15: #{tpu_custom_call.1} parent=1 // pred_check_branch
      %36 = sbr.rel (0) target = $region17
    $region16: #{tpu_custom_call.1} parent=1 // pred_region
      %37 = dma.done [#allocation3], 128
    $region17: #{tpu_custom_call.1} parent=1 // pred_fallthru
      _
    // Predicated region
    $region18: #{tpu_custom_call.1} parent=1 // pred_check
      _
    $region19: #{tpu_custom_call.1} parent=1 // pred_check_branch
      %39 = sbr.rel (0) target = $region21
    $region20: #{tpu_custom_call.1} parent=1 // pred_region
      %40 = dma.done [#allocation6], 512
    $region21: #{tpu_custom_call.1} parent=1 // pred_fallthru
      _
    %v41 = vld [vmem:[#allocation2] sm:$0xff]
    %v42 = vld [vmem:[#allocation5] sm:$0xff]
    %v43 = vld [vmem:[#allocation5 + $0x8] sm:$0xff]
    %v44 = vld [vmem:[#allocation5 + $0x10] sm:$0xff]
    %v45 = vld [vmem:[#allocation5 + $0x18] sm:$0xff]
    %v46 = vld [vmem:[%s2] sm:$0x1]
    %v48 = vlaneseq
    %v49 = vshrl.u32 %v48, 7
    %v50 = vsub.s32 0, %v49
    %v51 = vrot.slane %v46, %v50
    %vm53 = vcmask 261120
    %v55 = vsel %vm53, %v41, 0
    %57 = vmatprep.subr.mxu0 0.0
    %58 = vmatpush1.msra.mxu0 %v42
    %59 = vmatprep.subr.mxu0 0.0
    %60 = vmatpush1.msra.mxu0 %v43
    %61 = vmatprep.subr.mxu0 0.0
    %62 = vmatpush1.msra.mxu0 %v44
    %63 = vmatprep.subr.mxu0 0.0
    %64 = vmatpush1.msra.mxu0 %v45
    %65 = vmatprep.subr.mxu0 0.0
    %66 = vmatpush1.msra.mxu0 0.0
    %67 = vmatprep.subr.mxu0 0.0
    %68 = vmatpush1.msra.mxu0 0.0
    %69 = vmatprep.subr.mxu0 0.0
    %70 = vmatpush1.msra.mxu0 0.0
    %71 = vmatprep.subr.mxu0 0.0
    %72 = vmatpush1.msra.mxu0 0.0
    %73 = vmatprep.subr.mxu0 0.0
    %74 = vmatpush1.msra.mxu0 0.0
    %75 = vmatprep.subr.mxu0 0.0
    %76 = vmatpush1.msra.mxu0 0.0
    %77 = vmatprep.subr.mxu0 0.0
    %78 = vmatpush1.msra.mxu0 0.0
    %79 = vmatprep.subr.mxu0 0.0
    %80 = vmatpush1.msra.mxu0 0.0
    %81 = vmatprep.subr.mxu0 0.0
    %82 = vmatpush1.msra.mxu0 0.0
    %83 = vmatprep.subr.mxu0 0.0
    %84 = vmatpush1.msra.mxu0 0.0
    %85 = vmatprep.subr.mxu0 0.0
    %86 = vmatpush1.msra.mxu0 0.0
    %87 = vmatprep.subr.mxu0 0.0
    %88 = vmatpush1.msra.mxu0 0.0
    %89 = vmatprep.subr.mxu0 0.0
    %90 = vmatpush1.msra.mxu0 0.0
    %91 = vmatprep.subr.mxu0 0.0
    %92 = vmatpush1.msra.mxu0 0.0
    %93 = vmatprep.subr.mxu0 0.0
    %94 = vmatpush1.msra.mxu0 0.0
    %95 = vmatprep.subr.mxu0 0.0
    %96 = vmatpush1.msra.mxu0 0.0
    %97 = vmatprep.subr.mxu0 0.0
    %98 = vmatpush1.msra.mxu0 0.0
    %99 = vmatprep.subr.mxu0 0.0
    %100 = vmatpush1.msra.mxu0 0.0
    %101 = vmatprep.subr.mxu0 0.0
    %102 = vmatpush1.msra.mxu0 0.0
    %103 = vmatprep.subr.mxu0 0.0
    %104 = vmatpush1.msra.mxu0 0.0
    %105 = vmatprep.subr.mxu0 0.0
    %106 = vmatpush1.msra.mxu0 0.0
    %107 = vmatprep.subr.mxu0 0.0
    %108 = vmatpush1.msra.mxu0 0.0
    %109 = vmatprep.subr.mxu0 0.0
    %110 = vmatpush1.msra.mxu0 0.0
    %111 = vmatprep.subr.mxu0 0.0
    %112 = vmatpush1.msra.mxu0 0.0
    %113 = vmatprep.subr.mxu0 0.0
    %114 = vmatpush1.msra.mxu0 0.0
    %115 = vmatprep.subr.mxu0 0.0
    %116 = vmatpush1.msra.mxu0 0.0
    %117 = vmatprep.subr.mxu0 0.0
    %118 = vmatpush1.msra.mxu0 0.0
    %119 = vmatprep.subr.mxu0 0.0
    %120 = vmatpush1.msra.mxu0 0.0
    %121 = vmatprep.mubr.f32.mxu0 0.0
    %122 = vmatmul.mubr.f32.gmra.mrb[0].mxu0 %v55
    %v123 = vpop.f32.mrb[0].mxu0
    %v124 = vadd.f32 %v51, %v123
    %v125 = vpop.f32.mrb[0].mxu0
    %126 = vdwg.mxu0
    %vm127 = vcmask 64512
    %128 = vst.msk [vmem:[#allocation7] sm:$0xff] %vm127, %v124
    // Predicated region
    $region22: #{tpu_custom_call.1} parent=1 // pred_check
      _
    $region23: #{tpu_custom_call.1} parent=1 // pred_check_branch
      %130 = sbr.rel (0) target = $region25
    $region24: #{tpu_custom_call.1} parent=1 // pred_region
      %s132 = ssub.s32 128, 128
      %133 = vsyncadd [#allocation4], %s132
      %s135 = sshll.u32 [#allocation7], 4
      %s136 = int_to_ptr.vmem [resolvable:$true] %s135
      %138 = dma.vmem_to_hbm [thread:$0]  %s136, 128, %s3, [#allocation4]
    $region25: #{tpu_custom_call.1} parent=1 // pred_fallthru
      _
    // Predicated region
    $region26: #{tpu_custom_call.1} parent=1 // pred_check
      _
    $region27: #{tpu_custom_call.1} parent=1 // pred_check_branch
      %140 = sbr.rel (0) target = $region29
    $region28: #{tpu_custom_call.1} parent=1 // pred_region
      %141 = dma.done [#allocation4], 128
    $region29: #{tpu_custom_call.1} parent=1 // pred_fallthru
      _
    %142 = vsyncpa [#allocation3], 1
    %143 = vsyncpa [#allocation6], 1
    %144 = vsyncpa [#allocation4], 1

</llo_original>
